<compile_context>
chip_gen: v6e
topology: v6e:2x2x1
jax: 0.10.0
libtpu: 0.0.40
codegen_flags: <defaults>
</compile_context>

<pallas_src>
import jax
import jax.numpy as jnp
from jax.experimental import pallas as pl
from jax.experimental.pallas import tpu as pltpu


def _conv_bn_relu_kernel(x_ref, w_ref, shift_ref, o_ref):
    """One (batch, depth-tile) grid step: a single MXU matmul + BN shift + ReLU.

    x_ref:     (td*H, Kc_pad)    im2col'd rows: all 27 taps & Cin folded into the lane axis
    w_ref:     (Kc_pad, W*Cout)  block-Toeplitz weights, BN scale folded, rows zero-padded
    shift_ref: (1, W*Cout)       BN shift tiled across W (lane-dense)
    o_ref:     (td*H, W*Cout)    lane-dense output slab
    """
    acc = jnp.dot(x_ref[...], w_ref[...], preferred_element_type=jnp.float32)
    o_ref[...] = jnp.maximum(acc + shift_ref[...], 0.0).astype(o_ref.dtype)


def _pick_td(D, H, kc_pad, wcout, item_bytes, budget_bytes=12 * 1024 * 1024):
    """Largest divisor of D whose double-buffered in/out blocks fit the VMEM budget."""
    def cost(t):
        return 2 * t * H * (kc_pad * item_bytes + wcout * 4)
    td = D
    while td > 1 and (D % td or cost(td) > budget_bytes):
        td -= 1
    return td


def conv_bn_relu_3d(x_ncdhw, weight, gamma, beta, running_mean, running_var,
                    eps: float = 1e-5, *, td=None, use_bf16: bool = False):
    """x_ncdhw: (N, Cin, D, H, W) f32.  weight: (Cout, Cin, 3, 3, 3) f32 (Conv3d, bias=False)."""
    N, Cin, D, H, W = x_ncdhw.shape
    Cout, Cin_w, K, K2, K3 = weight.shape
    assert Cin_w == Cin and K == K2 == K3 == 3, "only kernel_size=3 supported"
    pad = 1  # TODO(synk): stride/pad/dilation other than the module defaults (1,1,1) not implemented.

    compute_dtype = jnp.bfloat16 if use_bf16 else jnp.float32
    item = 2 if use_bf16 else 4

    Dp, Hp, Wp = D + 2 * pad, H + 2 * pad, W + 2 * pad
    L = Wp * Cin                          # lanes per (kd, kh) tap
    Kc = K * K * L                        # full contraction depth (648 at the test shape)
    Kc_pad = ((Kc + 127) // 128) * 128    # pad to full 128-lane vregs / 8- & 16-sublane RHS tiles
    WCout = W * Cout                      # output lane width (128 at the test shape)

    if td is None:
        td = _pick_td(D, H, Kc_pad, WCout, item)
    else:
        td = max(1, min(int(td), D))
        while D % td:
            td -= 1
    n_dt = D // td

    # ---- layout glue (plain JAX): NDHWC, pad, fold Cin into lanes, im2col over (kd, kh) --------
    x = jnp.transpose(x_ncdhw, (0, 2, 3, 4, 1))                                   # (N,D,H,W,Cin)
    x = jnp.pad(x, ((0, 0), (pad, pad), (pad, pad), (pad, pad), (0, 0)))
    x = x.reshape(N, Dp, Hp, L).astype(compute_dtype)
    cols = [x[:, kd:kd + D, kh:kh + H, :] for kd in range(K) for kh in range(K)]
    lhs = jnp.concatenate(cols, axis=-1).reshape(N, D * H, Kc)                    # (N, D*H, Kc)
    lhs = jnp.pad(lhs, ((0, 0), (0, 0), (0, Kc_pad - Kc)))                        # (N, D*H, Kc_pad)

    # ---- fold BN into weights; block-Toeplitz over (kw, Cin); stack (kd, kh) into the rows -----
    scale = (gamma / jnp.sqrt(running_var + eps)).astype(jnp.float32)             # (Cout,)
    shift = (beta - running_mean * scale).astype(jnp.float32)                     # (Cout,)
    w_f = jnp.transpose(weight, (2, 3, 4, 1, 0)).astype(jnp.float32) * scale      # (kd,kh,kw,Cin,Cout)

    pos = jnp.arange(Wp)
    out_w = jnp.arange(W)
    kw = jnp.arange(K)
    sel = (pos[None, :, None] == (out_w[None, None, :] + kw[:, None, None])).astype(jnp.float32)
    # B[(kd*K+kh)*L + p*Cin + ci, w*Cout + co] = weight[co,ci,kd,kh,p-w] * scale[co] (0 outside tap)
    B = jnp.einsum('kpw,abkio->abpiwo', sel, w_f).reshape(Kc, WCout)
    B = jnp.pad(B, ((0, Kc_pad - Kc), (0, 0))).astype(compute_dtype)              # (Kc_pad, W*Cout)

    shift_tiled = jnp.tile(shift, W).reshape(1, WCout)                            # lane = w*Cout + co

    flops = 2 * N * (D * H) * Kc_pad * WCout
    bytes_accessed = (N * D * H * Kc_pad * item + Kc_pad * WCout * item
                      + WCout * 4 + N * D * H * WCout * 4)
    # VMEM guard (v7x has 64 MiB): double-buffered in/out blocks + weights + shift, 2x margin.
    vmem_needed = (2 * td * H * (Kc_pad * item + WCout * 4)
                   + 2 * Kc_pad * WCout * item + WCout * 4)
    vmem_limit = int(min(max(2 * vmem_needed, 16 * 1024 * 1024), 120 * 1024 * 1024))

    out = pl.pallas_call(
        _conv_bn_relu_kernel,
        out_shape=jax.ShapeDtypeStruct((N, D * H, WCout), jnp.float32),
        grid_spec=pltpu.PrefetchScalarGridSpec(
            num_scalar_prefetch=0,
            grid=(N, n_dt),
            in_specs=[
                pl.BlockSpec((None, td * H, Kc_pad), lambda n, dt: (n, dt, 0)),
                pl.BlockSpec((Kc_pad, WCout), lambda n, dt: (0, 0)),
                pl.BlockSpec((1, WCout), lambda n, dt: (0, 0)),
            ],
            out_specs=pl.BlockSpec((None, td * H, WCout), lambda n, dt: (n, dt, 0)),
        ),
        compiler_params=pltpu.CompilerParams(
            dimension_semantics=("parallel", "parallel"),
            vmem_limit_bytes=vmem_limit),
        cost_estimate=pl.CostEstimate(flops=flops, transcendentals=0,
                                      bytes_accessed=bytes_accessed),
    )(lhs, B, shift_tiled)

    # (N, D*H, W*Cout) -> (N, D, H, W, Cout) -> PyTorch NCDHW
    out = out.reshape(N, D, H, W, Cout)
    return jnp.transpose(out, (0, 4, 1, 2, 3))


def _reference(x_ncdhw, weight, gamma, beta, running_mean, running_var, eps=1e-5):
    """Pure-JAX reference (lax.conv + folded BN + ReLU)."""
    y = jax.lax.conv_general_dilated(
        x_ncdhw, weight,
        window_strides=(1, 1, 1),
        padding=((1, 1), (1, 1), (1, 1)),
        dimension_numbers=("NCDHW", "OIDHW", "NCDHW"),
        precision=jax.lax.Precision.HIGHEST,
    )
    scale = (gamma / jnp.sqrt(running_var + eps)).reshape(1, -1, 1, 1, 1)
    shift = (beta - running_mean * gamma / jnp.sqrt(running_var + eps)).reshape(1, -1, 1, 1, 1)
    return jnp.maximum(y * scale + shift, 0.0)


if __name__ == "__main__":
    # ConvBnReLU3D(in_channels=4, out_channels=8); W*Cout = 128 -> lane-dense output slab,
    # M = D*H = 128 per grid step, contraction depth 648 (padded to 768).
    N, Cin, Cout = 2, 4, 8
    D, H, W = 8, 16, 16

    key = jax.random.PRNGKey(0)
    kx, kw_ = jax.random.split(key)
    x = jax.random.normal(kx, (N, Cin, D, H, W), dtype=jnp.float32)
    weight = 0.1 * jax.random.normal(kw_, (Cout, Cin, 3, 3, 3), dtype=jnp.float32)

    # deterministic BatchNorm3d parameters / running stats (eval mode)
    gamma = 1.0 + 0.1 * jnp.arange(Cout, dtype=jnp.float32)
    beta = 0.05 * jnp.arange(Cout, dtype=jnp.float32)
    running_mean = 0.01 * jnp.arange(Cout, dtype=jnp.float32)
    running_var = 1.0 + 0.02 * jnp.arange(Cout, dtype=jnp.float32)

    y_ref = _reference(x, weight, gamma, beta, running_mean, running_var)

    # f32 matmul-input path
    y32 = jax.block_until_ready(
        conv_bn_relu_3d(x, weight, gamma, beta, running_mean, running_var, use_bf16=False))
    assert y32.shape == (N, Cout, D, H, W)
    assert jnp.max(jnp.abs(y32 - y_ref)) < 2e-2   # MXU f32 path (bf16 passes, f32 accumulation)

    # bf16 matmul-input path (fast path on v5e/v6e/v7x; f32 accumulation)
    y16 = jax.block_until_ready(
        conv_bn_relu_3d(x, weight, gamma, beta, running_mean, running_var, use_bf16=True))
    assert y16.shape == (N, Cout, D, H, W)
    assert jnp.max(jnp.abs(y16 - y_ref)) < 5e-2

    print("KERNEL_OK")
</pallas_src>

<mosaic_0001>
module attributes {stable_mosaic.version = 11 : i64} {
  func.func @_conv_bn_relu_kernel(%arg0: i32, %arg1: i32, %arg2: memref<1x128x768xf32, #tpu.memory_space<vmem>>, %arg3: memref<768x128xf32, #tpu.memory_space<vmem>>, %arg4: memref<1x128xf32, #tpu.memory_space<vmem>>, %arg5: memref<1x128x128xf32, #tpu.memory_space<vmem>>) attributes {dimension_semantics = [#tpu.dimension_semantics<parallel>, #tpu.dimension_semantics<parallel>], iteration_bounds = array<i64: 2, 1>, scalar_prefetch = 0 : i64, scratch_operands = 0 : i64, tpu.core_type = #tpu.core_type<tc>, window_params = [{transform_indices = @transform_0, window_bounds = array<i64: 1, 128, 768>}, {pipeline_mode = #tpu.pipeline_mode<synchronous>, transform_indices = @transform_1, window_bounds = array<i64: 768, 128>}, {pipeline_mode = #tpu.pipeline_mode<synchronous>, transform_indices = @transform_2, window_bounds = array<i64: 1, 128>}, {transform_indices = @transform_3, window_bounds = array<i64: 1, 128, 128>}]} {
    %c0 = arith.constant 0 : index
    %c0_0 = arith.constant 0 : index
    %c0_1 = arith.constant 0 : index
    %0 = vector.load %arg2[%c0, %c0_0, %c0_1] : memref<1x128x768xf32, #tpu.memory_space<vmem>>, vector<1x128x768xf32>
    %1 = vector.shape_cast %0 : vector<1x128x768xf32> to vector<128x768xf32>
    %c0_2 = arith.constant 0 : index
    %c0_3 = arith.constant 0 : index
    %2 = vector.load %arg3[%c0_2, %c0_3] : memref<768x128xf32, #tpu.memory_space<vmem>>, vector<768x128xf32>
    %cst = arith.constant dense<0.000000e+00> : vector<128x128xf32>
    %3 = tpu.matmul %1, %2, %cst {dimension_numbers = #tpu.dot_dimension_numbers<[1], [0], [0], [1], [0, 0, 1, 1], [], []>} : vector<128x768xf32>, vector<768x128xf32>, vector<128x128xf32> -> vector<128x128xf32>
    %c0_4 = arith.constant 0 : index
    %c0_5 = arith.constant 0 : index
    %4 = vector.load %arg4[%c0_4, %c0_5] : memref<1x128xf32, #tpu.memory_space<vmem>>, vector<1x128xf32>
    %5 = vector.broadcast %4 : vector<1x128xf32> to vector<128x128xf32>
    %6 = arith.addf %3, %5 : vector<128x128xf32>
    %cst_6 = arith.constant 0.000000e+00 : f32
    %7 = vector.broadcast %cst_6 : f32 to vector<128x128xf32>
    %8 = arith.maximumf %6, %7 : vector<128x128xf32>
    %c0_7 = arith.constant 0 : index
    %c0_8 = arith.constant 0 : index
    %c0_9 = arith.constant 0 : index
    %9 = vector.load %arg5[%c0_7, %c0_8, %c0_9] : memref<1x128x128xf32, #tpu.memory_space<vmem>>, vector<1x128x128xf32>
    %10 = vector.shape_cast %9 : vector<1x128x128xf32> to vector<128x128xf32>
    %11 = vector.shape_cast %8 : vector<128x128xf32> to vector<1x128x128xf32>
    tpu.vector_store %arg5[%c0_7, %c0_8, %c0_9], %11 {strides = array<i32>} : memref<1x128x128xf32, #tpu.memory_space<vmem>>, vector<1x128x128xf32>,
    return
  }
  func.func @transform_0(%arg0: i32, %arg1: i32) -> (i32, i32, i32) {
    %c0_i32 = arith.constant 0 : i32
    %c0_i32_0 = arith.constant 0 : i32
    return %arg0, %arg1, %c0_i32 : i32, i32, i32
  }
  func.func @transform_1(%arg0: i32, %arg1: i32) -> (i32, i32) {
    %c0_i32 = arith.constant 0 : i32
    %c0_i32_0 = arith.constant 0 : i32
    %c0_i32_1 = arith.constant 0 : i32
    return %c0_i32, %c0_i32_0 : i32, i32
  }
  func.func @transform_2(%arg0: i32, %arg1: i32) -> (i32, i32) {
    %c0_i32 = arith.constant 0 : i32
    %c0_i32_0 = arith.constant 0 : i32
    %c0_i32_1 = arith.constant 0 : i32
    return %c0_i32, %c0_i32_0 : i32, i32
  }
  func.func @transform_3(%arg0: i32, %arg1: i32) -> (i32, i32, i32) {
    %c0_i32 = arith.constant 0 : i32
    %c0_i32_0 = arith.constant 0 : i32
    return %arg0, %arg1, %c0_i32 : i32, i32, i32
  }
}

</mosaic_0001>

<llo_original>
// kernel: tpu_custom_call.1
$region0: #{tpu_custom_call.1}
  #allocation0 [shape = 'u32[]', space=smem, size = 0x4, offset = 0x4, fixed_abs, tag = 'smem constant byte address 0x4 - core index']
  #allocation1 [shape = 'u32[144,128]{1,0:T(1,128)}', space=vmem, size = 0x12000, scoped, tag = 'internal scratch']
  %s0 = inlined_call_operand.hbm [shape: f32[2,128,768], index: 0, kind: input, shape index: {}]
  %s1 = inlined_call_operand.hbm [shape: f32[768,128], index: 1, kind: input, shape index: {}]
  %s2 = inlined_call_operand.vmem [shape: f32[1,128], index: 2, kind: input, shape index: {}]
  %s3 = inlined_call_operand.hbm [shape: f32[2,128,128], index: 3, kind: output, shape index: {}]
  %s4 = sld [smem:[#allocation0]]
  $region53: #{tpu_custom_call.1} parent=0
    _
  %s6 = ssub.s32 1, %s4
  %s7 = scalar_select 0, %s6, %s4
  $region1: #{tpu_custom_call.1} parent=0
    #allocation2 [shape = 'u8[786432]{0}', space=vmem, size = 0xc0000, scoped, tag = 'input window, operand 0']
    #allocation3 [shape = 's32[2]{0}', space=sflag, size = 0x8, scoped, tag = 'scoped memory for tpu_custom_call.1']
    #allocation4 [shape = 's32[2]{0}', space=sflag, size = 0x8, scoped, tag = 'scoped memory for tpu_custom_call.1']
    #allocation5 [shape = 'u8[393216]{0}', space=vmem, size = 0x60000, scoped, tag = 'input window, operand 1, single buffered']
    #allocation6 [shape = 's32[1]{0}', space=sflag, size = 0x4, scoped, tag = 'scoped memory for tpu_custom_call.1']
    #allocation7 [shape = 'u8[131072]{0}', space=vmem, size = 0x20000, scoped, tag = 'output window, operand 0']
    %8 = vsyncpa [#allocation3], 0
    %s9 = scalar_lea.sflag [#allocation3], 1
    %10 = vsyncpa %s9, 0
    %11 = vsyncpa [#allocation6], 0
    %12 = vsyncpa [#allocation4], 0
    %s13 = scalar_lea.sflag [#allocation4], 1
    %14 = vsyncpa %s13, 0
    loop: start=0, step=1, limit=4
    $region2: #{tpu_custom_call.1} parent=1 // loop_pre_header
      _
    $region3: #{tpu_custom_call.1} parent=1 // loop_header
      %s16 = sphi 0, %s20
      %p17 = scmp.ge.s32.totalorder %s16, 4
      %s23 = sphi 0, %s35
      %s24 = sphi 0, %s31
      %s25 = sphi 0, %s23
      %s26 = sphi 0, %s24
      %s27 = sphi 0, %s25
      %s28 = sphi 0, %s26
      %s40 = sphi 0, %s42
      %s43 = sphi 0, %s40
      %s44 = sphi 0, %s43
      %s60 = sphi 0, %s44
      %s64 = sphi 0, %s64
      %s66 = sphi 0, %s64
      %s67 = sphi 0, %s66
      %s81 = sphi 0, %s67
      %s85 = sphi 0, %s85
      %s87 = sphi 0, %s85
      %s88 = sphi 0, %s87
      %s102 = sphi 0, %s88
      %s110 = sphi 0, %s112
      %s113 = sphi 0, %s110
      %s114 = sphi 0, %s113
      %s130 = sphi 0, %s114
    $region4: #{tpu_custom_call.1} parent=1 // loop_header_branch
      %19 = sbr.rel (%p17) target = $region8
    $region5: #{tpu_custom_call.1} parent=1 // loop_body
      %s21 = ssub.s32 %s16, 1
      %s22 = ssub.s32 %s16, 2
      %s29 = sadd.s32 1, %s24
      %p30 = scmp.ge.s32.totalorder %s29, 1
      %s31 = scalar_select %p30, 0, %s29
      %s32 = sadd.s32 1, %s23
      %s33 = scalar_select %p30, %s32, %s23
      %p34 = scmp.ge.s32.totalorder %s33, 2
      %s35 = scalar_select %p34, 0, %s33
      %s36 = ssub.s32 %s23, %s35
      %s37 = ssub.s32 %s24, %s31
      %s38 = sor.u32 %s36, %s37
      %p39 = scmp.eq.s32.totalorder %s38, 0
      %s41 = sadd.s32 %s40, 1
      %s42 = scalar_select %p39, %s40, %s41
      %p45 = pneg %p39
      %p46 = scmp.eq.s32.totalorder %s16, 1
      %p47 = por %p45, %p46
      %p48 = scmp.ne.s32.totalorder %s40, %s43
      %p49 = scmp.eq.s32.totalorder %s16, 0
      %p50 = por %p48, %p49
      %p51 = scmp.ne.s32.totalorder %s40, %s43
      %p52 = scmp.eq.s32.totalorder %s21, 1
      %p53 = por %p51, %p52
      %p54 = scmp.ne.s32.totalorder %s43, %s44
      %p55 = scmp.eq.s32.totalorder %s21, 0
      %p56 = por %p54, %p55
      %p57 = scmp.ne.s32.totalorder %s43, %s44
      %p58 = scmp.eq.s32.totalorder %s22, 1
      %p59 = por %p57, %p58
      %p61 = scmp.ne.s32.totalorder %s44, %s60
      %p62 = scmp.eq.s32.totalorder %s22, 0
      %p63 = por %p61, %p62
      %s65 = sadd.s32 %s64, 1
      %p68 = scmp.eq.s32.totalorder %s16, 1
      %p69 = scmp.ne.s32.totalorder %s64, %s66
      %p70 = scmp.eq.s32.totalorder %s16, 0
      %p71 = por %p69, %p70
      %p72 = scmp.ne.s32.totalorder %s64, %s66
      %p73 = scmp.eq.s32.totalorder %s21, 1
      %p74 = por %p72, %p73
      %p75 = scmp.ne.s32.totalorder %s66, %s67
      %p76 = scmp.eq.s32.totalorder %s21, 0
      %p77 = por %p75, %p76
      %p78 = scmp.ne.s32.totalorder %s66, %s67
      %p79 = scmp.eq.s32.totalorder %s22, 1
      %p80 = por %p78, %p79
      %p82 = scmp.ne.s32.totalorder %s67, %s81
      %p83 = scmp.eq.s32.totalorder %s22, 0
      %p84 = por %p82, %p83
      %s86 = sadd.s32 %s85, 1
      %p89 = scmp.eq.s32.totalorder %s16, 1
      %p90 = scmp.ne.s32.totalorder %s85, %s87
      %p91 = scmp.eq.s32.totalorder %s16, 0
      %p92 = por %p90, %p91
      %p93 = scmp.ne.s32.totalorder %s85, %s87
      %p94 = scmp.eq.s32.totalorder %s21, 1
      %p95 = por %p93, %p94
      %p96 = scmp.ne.s32.totalorder %s87, %s88
      %p97 = scmp.eq.s32.totalorder %s21, 0
      %p98 = por %p96, %p97
      %p99 = scmp.ne.s32.totalorder %s87, %s88
      %p100 = scmp.eq.s32.totalorder %s22, 1
      %p101 = por %p99, %p100
      %p103 = scmp.ne.s32.totalorder %s88, %s102
      %p104 = scmp.eq.s32.totalorder %s22, 0
      %p105 = por %p103, %p104
      %s106 = ssub.s32 %s23, %s35
      %s107 = ssub.s32 %s24, %s31
      %s108 = sor.u32 %s106, %s107
      %p109 = scmp.eq.s32.totalorder %s108, 0
      %s111 = sadd.s32 %s110, 1
      %s112 = scalar_select %p109, %s110, %s111
      %p115 = pneg %p109
      %p116 = scmp.eq.s32.totalorder %s16, 1
      %p117 = por %p115, %p116
      %p118 = scmp.ne.s32.totalorder %s110, %s113
      %p119 = scmp.eq.s32.totalorder %s16, 0
      %p120 = por %p118, %p119
      %p121 = scmp.ne.s32.totalorder %s110, %s113
      %p122 = scmp.eq.s32.totalorder %s21, 1
      %p123 = por %p121, %p122
      %p124 = scmp.ne.s32.totalorder %s113, %s114
      %p125 = scmp.eq.s32.totalorder %s21, 0
      %p126 = por %p124, %p125
      %p127 = scmp.ne.s32.totalorder %s113, %s114
      %p128 = scmp.eq.s32.totalorder %s22, 1
      %p129 = por %p127, %p128
      %p131 = scmp.ne.s32.totalorder %s114, %s130
      %p132 = scmp.eq.s32.totalorder %s22, 0
      %p133 = por %p131, %p132
      %p134 = scmp.le.s32.totalorder 1, %s16
      %p135 = scmp.lt.s32.totalorder %s16, 3
      %p136 = pnand %p134, %p135
      %p137 = pneg %p136
      // Predicated region
      $region9: #{tpu_custom_call.1} parent=5 // pred_check
        _
      $region10: #{tpu_custom_call.1} parent=5 // pred_check_branch
        %139 = sbr.rel (%p136) target = $region12
      $region11: #{tpu_custom_call.1} parent=5 // pred_region
        %s140 = ssub.s32 %s16, 1
        // Predicated region
        $region13: #{tpu_custom_call.1} parent=11 // pred_check
          %p141 = pneg %p77
        $region14: #{tpu_custom_call.1} parent=11 // pred_check_branch
          %143 = sbr.rel (%p141) target = $region16
        $region15: #{tpu_custom_call.1} parent=11 // pred_region
          %s145 = ssub.s32 12288, 12288
          %146 = vsyncadd [#allocation6], %s145
          %s147 = sshll.u32 [#allocation5], 4
          %s148 = int_to_ptr.vmem [resolvable:$true] %s147
          %153 = dma.hbm_to_vmem [thread:$0]  %s1, 12288, %s148, [#allocation6], 128, 128, 8
        $region16: #{tpu_custom_call.1} parent=11 // pred_fallthru
          _
        // Predicated region
        $region17: #{tpu_custom_call.1} parent=11 // pred_check
          %p154 = pneg %p98
        $region18: #{tpu_custom_call.1} parent=11 // pred_check_branch
          %156 = sbr.rel (%p154) target = $region20
        $region19: #{tpu_custom_call.1} parent=11 // pred_region
          _
        $region20: #{tpu_custom_call.1} parent=11 // pred_fallthru
          _
      $region12: #{tpu_custom_call.1} parent=5 // pred_fallthru
        _
      %p157 = scmp.lt.s32.totalorder %s16, 2
      // Predicated region
      $region21: #{tpu_custom_call.1} parent=5 // pred_check
        %p158 = pneg %p157
      $region22: #{tpu_custom_call.1} parent=5 // pred_check_branch
        %160 = sbr.rel (%p158) target = $region24
      $region23: #{tpu_custom_call.1} parent=5 // pred_region
        // Predicated region
        $region25: #{tpu_custom_call.1} parent=23 // pred_check
          %p161 = pneg %p50
        $region26: #{tpu_custom_call.1} parent=23 // pred_check_branch
          %163 = sbr.rel (%p161) target = $region28
        $region27: #{tpu_custom_call.1} parent=23 // pred_region
          %s164 = sand.u32 %s40, 1
          %s165 = scalar_lea.sflag [#allocation3], %s164
          %s166 = sand.u32 %s40, 1
          %s167 = smul.addr %s166, 768
          %s168 = scalar_lea.vmem [#allocation2], %s167
          %s169 = smul.u32 16, %s24
          %s171 = ssub.s32 12288, 12288
          %172 = vsyncadd %s165, %s171
          %s173 = smul.addr %s169, 6
          %s174 = smul.addr %s23, 96
          %s175 = sadd.s32 %s173, %s174
          %s176 = smul.addr %s175, 128
          %s177 = scalar_lea.hbm %s0, %s176
          %s178 = sshll.u32 %s168, 4
          %s179 = int_to_ptr.vmem [resolvable:$true] %s178
          %184 = dma.hbm_to_vmem [thread:$0]  %s177, 12288, %s179, %s165, 768, 768, 48
        $region28: #{tpu_custom_call.1} parent=23 // pred_fallthru
          _
      $region24: #{tpu_custom_call.1} parent=5 // pred_fallthru
        _
      %p185 = scmp.le.s32.totalorder 1, %s16
      %p186 = scmp.lt.s32.totalorder %s16, 3
      %p187 = pnand %p185, %p186
      %p188 = pneg %p187
      // Predicated region
      $region29: #{tpu_custom_call.1} parent=5 // pred_check
        _
      $region30: #{tpu_custom_call.1} parent=5 // pred_check_branch
        %190 = sbr.rel (%p187) target = $region32
      $region31: #{tpu_custom_call.1} parent=5 // pred_region
        %s191 = ssub.s32 %s16, 1
        %s192 = sand.u32 %s43, 1
        %s193 = scalar_lea.sflag [#allocation3], %s192
        %s194 = sand.u32 %s43, 1
        %s195 = smul.addr %s194, 768
        %s196 = scalar_lea.vmem [#allocation2], %s195
        // Predicated region
        $region33: #{tpu_custom_call.1} parent=31 // pred_check
          %p197 = pneg %p56
        $region34: #{tpu_custom_call.1} parent=31 // pred_check_branch
          %199 = sbr.rel (%p197) target = $region36
        $region35: #{tpu_custom_call.1} parent=31 // pred_region
          %200 = dma.done %s193, 12288
        $region36: #{tpu_custom_call.1} parent=31 // pred_fallthru
          _
        // Predicated region
        $region37: #{tpu_custom_call.1} parent=31 // pred_check
          %p201 = pneg %p77
        $region38: #{tpu_custom_call.1} parent=31 // pred_check_branch
          %203 = sbr.rel (%p201) target = $region40
        $region39: #{tpu_custom_call.1} parent=31 // pred_region
          %204 = dma.done [#allocation6], 12288
        $region40: #{tpu_custom_call.1} parent=31 // pred_fallthru
          _
        %s205 = sand.u32 %s43, 1
        %s206 = scalar_lea.sflag [#allocation3], %s205
        %s207 = sand.u32 %s43, 1
        %s208 = smul.addr %s207, 768
        %s209 = scalar_lea.vmem [#allocation2], %s208
        %p210 = pneg %p56
        %p211 = pneg %p53
        %p212 = pneg %p77
        %p213 = pneg %p74
        %p214 = pneg %p98
        %p215 = pneg %p95
        %p216 = pneg %p126
        %p217 = pneg %p123
        %s218 = sand.u32 %s113, 1
        %s219 = scalar_lea.sflag [#allocation4], %s218
        %s220 = sand.u32 %s113, 1
        %s221 = smul.addr %s220, 128
        %s222 = scalar_lea.vmem [#allocation7], %s221
        %s223 = smul.u32 16, %s26
        %s224 = smul.u32 16, %s26
        %v225 = vld [vmem:[%s196] sm:$0xff]
        %v226 = vld [vmem:[%s196 + $0x8] sm:$0xff]
        %v227 = vld [vmem:[%s196 + $0x10] sm:$0xff]
        %v228 = vld [vmem:[%s196 + $0x18] sm:$0xff]
        %v229 = vld [vmem:[%s196 + $0x20] sm:$0xff]
        %v230 = vld [vmem:[%s196 + $0x28] sm:$0xff]
        %v231 = vld [vmem:[%s196 + $0x30] sm:$0xff]
        %v232 = vld [vmem:[%s196 + $0x38] sm:$0xff]
        %v233 = vld [vmem:[%s196 + $0x40] sm:$0xff]
        %v234 = vld [vmem:[%s196 + $0x48] sm:$0xff]
        %v235 = vld [vmem:[%s196 + $0x50] sm:$0xff]
        %v236 = vld [vmem:[%s196 + $0x58] sm:$0xff]
        %v237 = vld [vmem:[%s196 + $0x60] sm:$0xff]
        %v238 = vld [vmem:[%s196 + $0x68] sm:$0xff]
        %v239 = vld [vmem:[%s196 + $0x70] sm:$0xff]
        %v240 = vld [vmem:[%s196 + $0x78] sm:$0xff]
        %v241 = vld [vmem:[%s196 + $0x80] sm:$0xff]
        %v242 = vld [vmem:[%s196 + $0x88] sm:$0xff]
        %v243 = vld [vmem:[%s196 + $0x90] sm:$0xff]
        %v244 = vld [vmem:[%s196 + $0x98] sm:$0xff]
        %v245 = vld [vmem:[%s196 + $0xa0] sm:$0xff]
        %v246 = vld [vmem:[%s196 + $0xa8] sm:$0xff]
        %v247 = vld [vmem:[%s196 + $0xb0] sm:$0xff]
        %v248 = vld [vmem:[%s196 + $0xb8] sm:$0xff]
        %v249 = vld [vmem:[%s196 + $0xc0] sm:$0xff]
        %v250 = vld [vmem:[%s196 + $0xc8] sm:$0xff]
        %v251 = vld [vmem:[%s196 + $0xd0] sm:$0xff]
        %v252 = vld [vmem:[%s196 + $0xd8] sm:$0xff]
        %v253 = vld [vmem:[%s196 + $0xe0] sm:$0xff]
        %v254 = vld [vmem:[%s196 + $0xe8] sm:$0xff]
        %v255 = vld [vmem:[%s196 + $0xf0] sm:$0xff]
        %v256 = vld [vmem:[%s196 + $0xf8] sm:$0xff]
        %v257 = vld [vmem:[%s196 + $0x100] sm:$0xff]
        %v258 = vld [vmem:[%s196 + $0x108] sm:$0xff]
        %v259 = vld [vmem:[%s196 + $0x110] sm:$0xff]
        %v260 = vld [vmem:[%s196 + $0x118] sm:$0xff]
        %v261 = vld [vmem:[%s196 + $0x120] sm:$0xff]
        %v262 = vld [vmem:[%s196 + $0x128] sm:$0xff]
        %v263 = vld [vmem:[%s196 + $0x130] sm:$0xff]
        %v264 = vld [vmem:[%s196 + $0x138] sm:$0xff]
        %v265 = vld [vmem:[%s196 + $0x140] sm:$0xff]
        %v266 = vld [vmem:[%s196 + $0x148] sm:$0xff]
        %v267 = vld [vmem:[%s196 + $0x150] sm:$0xff]
        %v268 = vld [vmem:[%s196 + $0x158] sm:$0xff]
        %v269 = vld [vmem:[%s196 + $0x160] sm:$0xff]
        %v270 = vld [vmem:[%s196 + $0x168] sm:$0xff]
        %v271 = vld [vmem:[%s196 + $0x170] sm:$0xff]
        %v272 = vld [vmem:[%s196 + $0x178] sm:$0xff]
        %v273 = vld [vmem:[%s196 + $0x180] sm:$0xff]
        %v274 = vld [vmem:[%s196 + $0x188] sm:$0xff]
        %v275 = vld [vmem:[%s196 + $0x190] sm:$0xff]
        %v276 = vld [vmem:[%s196 + $0x198] sm:$0xff]
        %v277 = vld [vmem:[%s196 + $0x1a0] sm:$0xff]
        %v278 = vld [vmem:[%s196 + $0x1a8] sm:$0xff]
        %v279 = vld [vmem:[%s196 + $0x1b0] sm:$0xff]
        %v280 = vld [vmem:[%s196 + $0x1b8] sm:$0xff]
        %v281 = vld [vmem:[%s196 + $0x1c0] sm:$0xff]
        %v282 = vld [vmem:[%s196 + $0x1c8] sm:$0xff]
        %v283 = vld [vmem:[%s196 + $0x1d0] sm:$0xff]
        %v284 = vld [vmem:[%s196 + $0x1d8] sm:$0xff]
        %v285 = vld [vmem:[%s196 + $0x1e0] sm:$0xff]
        %v286 = vld [vmem:[%s196 + $0x1e8] sm:$0xff]
        %v287 = vld [vmem:[%s196 + $0x1f0] sm:$0xff]
        %v288 = vld [vmem:[%s196 + $0x1f8] sm:$0xff]
        %v289 = vld [vmem:[%s196 + $0x200] sm:$0xff]
        %v290 = vld [vmem:[%s196 + $0x208] sm:$0xff]
        %v291 = vld [vmem:[%s196 + $0x210] sm:$0xff]
        %v292 = vld [vmem:[%s196 + $0x218] sm:$0xff]
        %v293 = vld [vmem:[%s196 + $0x220] sm:$0xff]
        %v294 = vld [vmem:[%s196 + $0x228] sm:$0xff]
        %v295 = vld [vmem:[%s196 + $0x230] sm:$0xff]
        %v296 = vld [vmem:[%s196 + $0x238] sm:$0xff]
        %v297 = vld [vmem:[%s196 + $0x240] sm:$0xff]
        %v298 = vld [vmem:[%s196 + $0x248] sm:$0xff]
        %v299 = vld [vmem:[%s196 + $0x250] sm:$0xff]
        %v300 = vld [vmem:[%s196 + $0x258] sm:$0xff]
        %v301 = vld [vmem:[%s196 + $0x260] sm:$0xff]
        %v302 = vld [vmem:[%s196 + $0x268] sm:$0xff]
        %v303 = vld [vmem:[%s196 + $0x270] sm:$0xff]
        %v304 = vld [vmem:[%s196 + $0x278] sm:$0xff]
        %v305 = vld [vmem:[%s196 + $0x280] sm:$0xff]
        %v306 = vld [vmem:[%s196 + $0x288] sm:$0xff]
        %v307 = vld [vmem:[%s196 + $0x290] sm:$0xff]
        %v308 = vld [vmem:[%s196 + $0x298] sm:$0xff]
        %v309 = vld [vmem:[%s196 + $0x2a0] sm:$0xff]
        %v310 = vld [vmem:[%s196 + $0x2a8] sm:$0xff]
        %v311 = vld [vmem:[%s196 + $0x2b0] sm:$0xff]
        %v312 = vld [vmem:[%s196 + $0x2b8] sm:$0xff]
        %v313 = vld [vmem:[%s196 + $0x2c0] sm:$0xff]
        %v314 = vld [vmem:[%s196 + $0x2c8] sm:$0xff]
        %v315 = vld [vmem:[%s196 + $0x2d0] sm:$0xff]
        %v316 = vld [vmem:[%s196 + $0x2d8] sm:$0xff]
        %v317 = vld [vmem:[%s196 + $0x2e0] sm:$0xff]
        %v318 = vld [vmem:[%s196 + $0x2e8] sm:$0xff]
        %v319 = vld [vmem:[%s196 + $0x2f0] sm:$0xff]
        %v320 = vld [vmem:[%s196 + $0x2f8] sm:$0xff]
        %v321 = vld [vmem:[#allocation5] sm:$0xff]
        %v322 = vld [vmem:[#allocation5 + $0x8] sm:$0xff]
        %v323 = vld [vmem:[#allocation5 + $0x10] sm:$0xff]
        %v324 = vld [vmem:[#allocation5 + $0x18] sm:$0xff]
        %v325 = vld [vmem:[#allocation5 + $0x20] sm:$0xff]
        %v326 = vld [vmem:[#allocation5 + $0x28] sm:$0xff]
        %v327 = vld [vmem:[#allocation5 + $0x30] sm:$0xff]
        %v328 = vld [vmem:[#allocation5 + $0x38] sm:$0xff]
        %v329 = vld [vmem:[#allocation5 + $0x40] sm:$0xff]
        %v330 = vld [vmem:[#allocation5 + $0x48] sm:$0xff]
        %v331 = vld [vmem:[#allocation5 + $0x50] sm:$0xff]
        %v332 = vld [vmem:[#allocation5 + $0x58] sm:$0xff]
        %v333 = vld [vmem:[#allocation5 + $0x60] sm:$0xff]
        %v334 = vld [vmem:[#allocation5 + $0x68] sm:$0xff]
        %v335 = vld [vmem:[#allocation5 + $0x70] sm:$0xff]
        %v336 = vld [vmem:[#allocation5 + $0x78] sm:$0xff]
        %v337 = vld [vmem:[#allocation5 + $0x80] sm:$0xff]
        %v338 = vld [vmem:[#allocation5 + $0x88] sm:$0xff]
        %v339 = vld [vmem:[#allocation5 + $0x90] sm:$0xff]
        %v340 = vld [vmem:[#allocation5 + $0x98] sm:$0xff]
        %v341 = vld [vmem:[#allocation5 + $0xa0] sm:$0xff]
        %v342 = vld [vmem:[#allocation5 + $0xa8] sm:$0xff]
        %v343 = vld [vmem:[#allocation5 + $0xb0] sm:$0xff]
        %v344 = vld [vmem:[#allocation5 + $0xb8] sm:$0xff]
        %v345 = vld [vmem:[#allocation5 + $0xc0] sm:$0xff]
        %v346 = vld [vmem:[#allocation5 + $0xc8] sm:$0xff]
        %v347 = vld [vmem:[#allocation5 + $0xd0] sm:$0xff]
        %v348 = vld [vmem:[#allocation5 + $0xd8] sm:$0xff]
        %v349 = vld [vmem:[#allocation5 + $0xe0] sm:$0xff]
        %v350 = vld [vmem:[#allocation5 + $0xe8] sm:$0xff]
        %v351 = vld [vmem:[#allocation5 + $0xf0] sm:$0xff]
        %v352 = vld [vmem:[#allocation5 + $0xf8] sm:$0xff]
        %v353 = vld [vmem:[#allocation5 + $0x100] sm:$0xff]
        %v354 = vld [vmem:[#allocation5 + $0x108] sm:$0xff]
        %v355 = vld [vmem:[#allocation5 + $0x110] sm:$0xff]
        %v356 = vld [vmem:[#allocation5 + $0x118] sm:$0xff]
        %v357 = vld [vmem:[#allocation5 + $0x120] sm:$0xff]
        %v358 = vld [vmem:[#allocation5 + $0x128] sm:$0xff]
        %v359 = vld [vmem:[#allocation5 + $0x130] sm:$0xff]
        %v360 = vld [vmem:[#allocation5 + $0x138] sm:$0xff]
        %v361 = vld [vmem:[#allocation5 + $0x140] sm:$0xff]
        %v362 = vld [vmem:[#allocation5 + $0x148] sm:$0xff]
        %v363 = vld [vmem:[#allocation5 + $0x150] sm:$0xff]
        %v364 = vld [vmem:[#allocation5 + $0x158] sm:$0xff]
        %v365 = vld [vmem:[#allocation5 + $0x160] sm:$0xff]
        %v366 = vld [vmem:[#allocation5 + $0x168] sm:$0xff]
        %v367 = vld [vmem:[#allocation5 + $0x170] sm:$0xff]
        %v368 = vld [vmem:[#allocation5 + $0x178] sm:$0xff]
        %v369 = vld [vmem:[#allocation5 + $0x180] sm:$0xff]
        %v370 = vld [vmem:[#allocation5 + $0x188] sm:$0xff]
        %v371 = vld [vmem:[#allocation5 + $0x190] sm:$0xff]
        %v372 = vld [vmem:[#allocation5 + $0x198] sm:$0xff]
        %v373 = vld [vmem:[#allocation5 + $0x1a0] sm:$0xff]
        %v374 = vld [vmem:[#allocation5 + $0x1a8] sm:$0xff]
        %v375 = vld [vmem:[#allocation5 + $0x1b0] sm:$0xff]
        %v376 = vld [vmem:[#allocation5 + $0x1b8] sm:$0xff]
        %v377 = vld [vmem:[#allocation5 + $0x1c0] sm:$0xff]
        %v378 = vld [vmem:[#allocation5 + $0x1c8] sm:$0xff]
        %v379 = vld [vmem:[#allocation5 + $0x1d0] sm:$0xff]
        %v380 = vld [vmem:[#allocation5 + $0x1d8] sm:$0xff]
        %v381 = vld [vmem:[#allocation5 + $0x1e0] sm:$0xff]
        %v382 = vld [vmem:[#allocation5 + $0x1e8] sm:$0xff]
        %v383 = vld [vmem:[#allocation5 + $0x1f0] sm:$0xff]
        %v384 = vld [vmem:[#allocation5 + $0x1f8] sm:$0xff]
        %v385 = vld [vmem:[#allocation5 + $0x200] sm:$0xff]
        %v386 = vld [vmem:[#allocation5 + $0x208] sm:$0xff]
        %v387 = vld [vmem:[#allocation5 + $0x210] sm:$0xff]
        %v388 = vld [vmem:[#allocation5 + $0x218] sm:$0xff]
        %v389 = vld [vmem:[#allocation5 + $0x220] sm:$0xff]
        %v390 = vld [vmem:[#allocation5 + $0x228] sm:$0xff]
        %v391 = vld [vmem:[#allocation5 + $0x230] sm:$0xff]
        %v392 = vld [vmem:[#allocation5 + $0x238] sm:$0xff]
        %v393 = vld [vmem:[#allocation5 + $0x240] sm:$0xff]
        %v394 = vld [vmem:[#allocation5 + $0x248] sm:$0xff]
        %v395 = vld [vmem:[#allocation5 + $0x250] sm:$0xff]
        %v396 = vld [vmem:[#allocation5 + $0x258] sm:$0xff]
        %v397 = vld [vmem:[#allocation5 + $0x260] sm:$0xff]
        %v398 = vld [vmem:[#allocation5 + $0x268] sm:$0xff]
        %v399 = vld [vmem:[#allocation5 + $0x270] sm:$0xff]
        %v400 = vld [vmem:[#allocation5 + $0x278] sm:$0xff]
        %v401 = vld [vmem:[#allocation5 + $0x280] sm:$0xff]
        %v402 = vld [vmem:[#allocation5 + $0x288] sm:$0xff]
        %v403 = vld [vmem:[#allocation5 + $0x290] sm:$0xff]
        %v404 = vld [vmem:[#allocation5 + $0x298] sm:$0xff]
        %v405 = vld [vmem:[#allocation5 + $0x2a0] sm:$0xff]
        %v406 = vld [vmem:[#allocation5 + $0x2a8] sm:$0xff]
        %v407 = vld [vmem:[#allocation5 + $0x2b0] sm:$0xff]
        %v408 = vld [vmem:[#allocation5 + $0x2b8] sm:$0xff]
        %v409 = vld [vmem:[#allocation5 + $0x2c0] sm:$0xff]
        %v410 = vld [vmem:[#allocation5 + $0x2c8] sm:$0xff]
        %v411 = vld [vmem:[#allocation5 + $0x2d0] sm:$0xff]
        %v412 = vld [vmem:[#allocation5 + $0x2d8] sm:$0xff]
        %v413 = vld [vmem:[#allocation5 + $0x2e0] sm:$0xff]
        %v414 = vld [vmem:[#allocation5 + $0x2e8] sm:$0xff]
        %v415 = vld [vmem:[#allocation5 + $0x2f0] sm:$0xff]
        %v416 = vld [vmem:[#allocation5 + $0x2f8] sm:$0xff]
        %v417 = vld [vmem:[%s2] sm:$0x1]
        %v419 = vlaneseq
        %v420 = vshrl.u32 %v419, 7
        %v421 = vsub.s32 0, %v420
        %v422 = vrot.slane %v417, %v421
        %424 = vmatprep.subr.mxu0 0.0
        %425 = vmatpush1.msra.mxu0 %v336
        %426 = vmatprep.subr.mxu0 0.0
        %427 = vmatpush1.msra.mxu0 %v335
        %428 = vmatprep.subr.mxu0 0.0
        %429 = vmatpush1.msra.mxu0 %v334
        %430 = vmatprep.subr.mxu0 0.0
        %431 = vmatpush1.msra.mxu0 %v333
        %432 = vmatprep.subr.mxu0 0.0
        %433 = vmatpush1.msra.mxu0 %v332
        %434 = vmatprep.subr.mxu0 0.0
        %435 = vmatpush1.msra.mxu0 %v331
        %436 = vmatprep.subr.mxu0 0.0
        %437 = vmatpush1.msra.mxu0 %v330
        %438 = vmatprep.subr.mxu0 0.0
        %439 = vmatpush1.msra.mxu0 %v329
        %440 = vmatprep.subr.mxu0 0.0
        %441 = vmatpush1.msra.mxu0 %v328
        %442 = vmatprep.subr.mxu0 0.0
        %443 = vmatpush1.msra.mxu0 %v327
        %444 = vmatprep.subr.mxu0 0.0
        %445 = vmatpush1.msra.mxu0 %v326
        %446 = vmatprep.subr.mxu0 0.0
        %447 = vmatpush1.msra.mxu0 %v325
        %448 = vmatprep.subr.mxu0 0.0
        %449 = vmatpush1.msra.mxu0 %v324
        %450 = vmatprep.subr.mxu0 0.0
        %451 = vmatpush1.msra.mxu0 %v323
        %452 = vmatprep.subr.mxu0 0.0
        %453 = vmatpush1.msra.mxu0 %v322
        %454 = vmatprep.subr.mxu0 0.0
        %455 = vmatpush1.msra.mxu0 %v321
        %456 = vmatprep.subr.mxu0 0.0
        %457 = vmatpush2.msra.mxu0 %v352
        %458 = vmatprep.subr.mxu0 0.0
        %459 = vmatpush2.msra.mxu0 %v351
        %460 = vmatprep.subr.mxu0 0.0
        %461 = vmatpush2.msra.mxu0 %v350
        %462 = vmatprep.subr.mxu0 0.0
        %463 = vmatpush2.msra.mxu0 %v349
        %464 = vmatprep.subr.mxu0 0.0
        %465 = vmatpush2.msra.mxu0 %v348
        %466 = vmatprep.subr.mxu0 0.0
        %467 = vmatpush2.msra.mxu0 %v347
        %468 = vmatprep.subr.mxu0 0.0
        %469 = vmatpush2.msra.mxu0 %v346
        %470 = vmatprep.subr.mxu0 0.0
        %471 = vmatpush2.msra.mxu0 %v345
        %472 = vmatprep.subr.mxu0 0.0
        %473 = vmatpush2.msra.mxu0 %v344
        %474 = vmatprep.subr.mxu0 0.0
        %475 = vmatpush2.msra.mxu0 %v343
        %476 = vmatprep.subr.mxu0 0.0
        %477 = vmatpush2.msra.mxu0 %v342
        %478 = vmatprep.subr.mxu0 0.0
        %479 = vmatpush2.msra.mxu0 %v341
        %480 = vmatprep.subr.mxu0 0.0
        %481 = vmatpush2.msra.mxu0 %v340
        %482 = vmatprep.subr.mxu0 0.0
        %483 = vmatpush2.msra.mxu0 %v339
        %484 = vmatprep.subr.mxu0 0.0
        %485 = vmatpush2.msra.mxu0 %v338
        %486 = vmatprep.subr.mxu0 0.0
        %487 = vmatpush2.msra.mxu0 %v337
        %488 = vmatprep.mubr.f32.mxu0 %v226
        %489 = vmatmul.mubr.f32.gmra.mxu0 %v225
        %v490 = vpop.f32.mrf.mxu0
        %v491 = vadd.f32 %v422, %v490
        %v492 = vpop.f32.mrf.mxu0
        %493 = vmatprep.mubr.f32.mxu0 %v232
        %494 = vmatmul.mubr.f32.gmra.mxu0 %v231
        %v495 = vpop.f32.mrf.mxu0
        %v496 = vadd.f32 %v422, %v495
        %v497 = vpop.f32.mrf.mxu0
        %498 = vmatprep.mubr.f32.mxu0 %v238
        %499 = vmatmul.mubr.f32.gmra.mxu0 %v237
        %v500 = vpop.f32.mrf.mxu0
        %v501 = vadd.f32 %v422, %v500
        %v502 = vpop.f32.mrf.mxu0
        %503 = vmatprep.mubr.f32.mxu0 %v244
        %504 = vmatmul.mubr.f32.gmra.mxu0 %v243
        %v505 = vpop.f32.mrf.mxu0
        %v506 = vadd.f32 %v422, %v505
        %v507 = vpop.f32.mrf.mxu0
        %508 = vmatprep.mubr.f32.mxu0 %v250
        %509 = vmatmul.mubr.f32.gmra.mxu0 %v249
        %v510 = vpop.f32.mrf.mxu0
        %v511 = vadd.f32 %v422, %v510
        %v512 = vpop.f32.mrf.mxu0
        %513 = vmatprep.mubr.f32.mxu0 %v256
        %514 = vmatmul.mubr.f32.gmra.mxu0 %v255
        %v515 = vpop.f32.mrf.mxu0
        %v516 = vadd.f32 %v422, %v515
        %v517 = vpop.f32.mrf.mxu0
        %518 = vmatprep.mubr.f32.mxu0 %v262
        %519 = vmatmul.mubr.f32.gmra.mxu0 %v261
        %v520 = vpop.f32.mrf.mxu0
        %v521 = vadd.f32 %v422, %v520
        %v522 = vpop.f32.mrf.mxu0
        %523 = vmatprep.mubr.f32.mxu0 %v268
        %524 = vmatmul.mubr.f32.gmra.mxu0 %v267
        %v525 = vpop.f32.mrf.mxu0
        %v526 = vadd.f32 %v422, %v525
        %v527 = vpop.f32.mrf.mxu0
        %528 = vmatprep.mubr.f32.mxu0 %v274
        %529 = vmatmul.mubr.f32.gmra.mxu0 %v273
        %v530 = vpop.f32.mrf.mxu0
        %v531 = vadd.f32 %v422, %v530
        %v532 = vpop.f32.mrf.mxu0
        %533 = vmatprep.mubr.f32.mxu0 %v280
        %534 = vmatmul.mubr.f32.gmra.mxu0 %v279
        %v535 = vpop.f32.mrf.mxu0
        %v536 = vadd.f32 %v422, %v535
        %v537 = vpop.f32.mrf.mxu0
        %538 = vmatprep.mubr.f32.mxu0 %v286
        %539 = vmatmul.mubr.f32.gmra.mxu0 %v285
        %v540 = vpop.f32.mrf.mxu0
        %v541 = vadd.f32 %v422, %v540
        %v542 = vpop.f32.mrf.mxu0
        %543 = vmatprep.mubr.f32.mxu0 %v292
        %544 = vmatmul.mubr.f32.gmra.mxu0 %v291
        %v545 = vpop.f32.mrf.mxu0
        %v546 = vadd.f32 %v422, %v545
        %v547 = vpop.f32.mrf.mxu0
        %548 = vmatprep.mubr.f32.mxu0 %v298
        %549 = vmatmul.mubr.f32.gmra.mxu0 %v297
        %v550 = vpop.f32.mrf.mxu0
        %v551 = vadd.f32 %v422, %v550
        %v552 = vpop.f32.mrf.mxu0
        %553 = vmatprep.mubr.f32.mxu0 %v304
        %554 = vmatmul.mubr.f32.gmra.mxu0 %v303
        %v555 = vpop.f32.mrf.mxu0
        %v556 = vadd.f32 %v422, %v555
        %v557 = vpop.f32.mrf.mxu0
        %558 = vmatprep.mubr.f32.mxu0 %v310
        %559 = vmatmul.mubr.f32.gmra.mxu0 %v309
        %v560 = vpop.f32.mrf.mxu0
        %v561 = vadd.f32 %v422, %v560
        %v562 = vpop.f32.mrf.mxu0
        %563 = vmatprep.mubr.f32.mxu0 %v316
        %564 = vmatmul.mubr.f32.gmra.mxu0 %v315
        %v565 = vpop.f32.mrf.mxu0
        %v566 = vadd.f32 %v422, %v565
        %v567 = vpop.f32.mrf.mxu0
        %568 = vdwg.mxu0
        %569 = vmatprep.subr.mxu0 0.0
        %570 = vmatpush1.msra.mxu0 %v368
        %571 = vmatprep.subr.mxu0 0.0
        %572 = vmatpush1.msra.mxu0 %v367
        %573 = vmatprep.subr.mxu0 0.0
        %574 = vmatpush1.msra.mxu0 %v366
        %575 = vmatprep.subr.mxu0 0.0
        %576 = vmatpush1.msra.mxu0 %v365
        %577 = vmatprep.subr.mxu0 0.0
        %578 = vmatpush1.msra.mxu0 %v364
        %579 = vmatprep.subr.mxu0 0.0
        %580 = vmatpush1.msra.mxu0 %v363
        %581 = vmatprep.subr.mxu0 0.0
        %582 = vmatpush1.msra.mxu0 %v362
        %583 = vmatprep.subr.mxu0 0.0
        %584 = vmatpush1.msra.mxu0 %v361
        %585 = vmatprep.subr.mxu0 0.0
        %586 = vmatpush1.msra.mxu0 %v360
        %587 = vmatprep.subr.mxu0 0.0
        %588 = vmatpush1.msra.mxu0 %v359
        %589 = vmatprep.subr.mxu0 0.0
        %590 = vmatpush1.msra.mxu0 %v358
        %591 = vmatprep.subr.mxu0 0.0
        %592 = vmatpush1.msra.mxu0 %v357
        %593 = vmatprep.subr.mxu0 0.0
        %594 = vmatpush1.msra.mxu0 %v356
        %595 = vmatprep.subr.mxu0 0.0
        %596 = vmatpush1.msra.mxu0 %v355
        %597 = vmatprep.subr.mxu0 0.0
        %598 = vmatpush1.msra.mxu0 %v354
        %599 = vmatprep.subr.mxu0 0.0
        %600 = vmatpush1.msra.mxu0 %v353
        %601 = vmatprep.subr.mxu0 0.0
        %602 = vmatpush2.msra.mxu0 %v384
        %603 = vmatprep.subr.mxu0 0.0
        %604 = vmatpush2.msra.mxu0 %v383
        %605 = vmatprep.subr.mxu0 0.0
        %606 = vmatpush2.msra.mxu0 %v382
        %607 = vmatprep.subr.mxu0 0.0
        %608 = vmatpush2.msra.mxu0 %v381
        %609 = vmatprep.subr.mxu0 0.0
        %610 = vmatpush2.msra.mxu0 %v380
        %611 = vmatprep.subr.mxu0 0.0
        %612 = vmatpush2.msra.mxu0 %v379
        %613 = vmatprep.subr.mxu0 0.0
        %614 = vmatpush2.msra.mxu0 %v378
        %615 = vmatprep.subr.mxu0 0.0
        %616 = vmatpush2.msra.mxu0 %v377
        %617 = vmatprep.subr.mxu0 0.0
        %618 = vmatpush2.msra.mxu0 %v376
        %619 = vmatprep.subr.mxu0 0.0
        %620 = vmatpush2.msra.mxu0 %v375
        %621 = vmatprep.subr.mxu0 0.0
        %622 = vmatpush2.msra.mxu0 %v374
        %623 = vmatprep.subr.mxu0 0.0
        %624 = vmatpush2.msra.mxu0 %v373
        %625 = vmatprep.subr.mxu0 0.0
        %626 = vmatpush2.msra.mxu0 %v372
        %627 = vmatprep.subr.mxu0 0.0
        %628 = vmatpush2.msra.mxu0 %v371
        %629 = vmatprep.subr.mxu0 0.0
        %630 = vmatpush2.msra.mxu0 %v370
        %631 = vmatprep.subr.mxu0 0.0
        %632 = vmatpush2.msra.mxu0 %v369
        %633 = vmatprep.mubr.f32.mxu0 %v228
        %634 = vmatmul.mubr.f32.gmra.mxu0 %v227
        %v635 = vpop.f32.mrf.mxu0
        %v636 = vadd.f32 %v491, %v635
        %v637 = vpop.f32.mrf.mxu0
        %638 = vmatprep.mubr.f32.mxu0 %v234
        %639 = vmatmul.mubr.f32.gmra.mxu0 %v233
        %v640 = vpop.f32.mrf.mxu0
        %v641 = vadd.f32 %v496, %v640
        %v642 = vpop.f32.mrf.mxu0
        %643 = vmatprep.mubr.f32.mxu0 %v240
        %644 = vmatmul.mubr.f32.gmra.mxu0 %v239
        %v645 = vpop.f32.mrf.mxu0
        %v646 = vadd.f32 %v501, %v645
        %v647 = vpop.f32.mrf.mxu0
        %648 = vmatprep.mubr.f32.mxu0 %v246
        %649 = vmatmul.mubr.f32.gmra.mxu0 %v245
        %v650 = vpop.f32.mrf.mxu0
        %v651 = vadd.f32 %v506, %v650
        %v652 = vpop.f32.mrf.mxu0
        %653 = vmatprep.mubr.f32.mxu0 %v252
        %654 = vmatmul.mubr.f32.gmra.mxu0 %v251
        %v655 = vpop.f32.mrf.mxu0
        %v656 = vadd.f32 %v511, %v655
        %v657 = vpop.f32.mrf.mxu0
        %658 = vmatprep.mubr.f32.mxu0 %v258
        %659 = vmatmul.mubr.f32.gmra.mxu0 %v257
        %v660 = vpop.f32.mrf.mxu0
        %v661 = vadd.f32 %v516, %v660
        %v662 = vpop.f32.mrf.mxu0
        %663 = vmatprep.mubr.f32.mxu0 %v264
        %664 = vmatmul.mubr.f32.gmra.mxu0 %v263
        %v665 = vpop.f32.mrf.mxu0
        %v666 = vadd.f32 %v521, %v665
        %v667 = vpop.f32.mrf.mxu0
        %668 = vmatprep.mubr.f32.mxu0 %v270
        %669 = vmatmul.mubr.f32.gmra.mxu0 %v269
        %v670 = vpop.f32.mrf.mxu0
        %v671 = vadd.f32 %v526, %v670
        %v672 = vpop.f32.mrf.mxu0
        %673 = vmatprep.mubr.f32.mxu0 %v276
        %674 = vmatmul.mubr.f32.gmra.mxu0 %v275
        %v675 = vpop.f32.mrf.mxu0
        %v676 = vadd.f32 %v531, %v675
        %v677 = vpop.f32.mrf.mxu0
        %678 = vmatprep.mubr.f32.mxu0 %v282
        %679 = vmatmul.mubr.f32.gmra.mxu0 %v281
        %v680 = vpop.f32.mrf.mxu0
        %v681 = vadd.f32 %v536, %v680
        %v682 = vpop.f32.mrf.mxu0
        %683 = vmatprep.mubr.f32.mxu0 %v288
        %684 = vmatmul.mubr.f32.gmra.mxu0 %v287
        %v685 = vpop.f32.mrf.mxu0
        %v686 = vadd.f32 %v541, %v685
        %v687 = vpop.f32.mrf.mxu0
        %688 = vmatprep.mubr.f32.mxu0 %v294
        %689 = vmatmul.mubr.f32.gmra.mxu0 %v293
        %v690 = vpop.f32.mrf.mxu0
        %v691 = vadd.f32 %v546, %v690
        %v692 = vpop.f32.mrf.mxu0
        %693 = vmatprep.mubr.f32.mxu0 %v300
        %694 = vmatmul.mubr.f32.gmra.mxu0 %v299
        %v695 = vpop.f32.mrf.mxu0
        %v696 = vadd.f32 %v551, %v695
        %v697 = vpop.f32.mrf.mxu0
        %698 = vmatprep.mubr.f32.mxu0 %v306
        %699 = vmatmul.mubr.f32.gmra.mxu0 %v305
        %v700 = vpop.f32.mrf.mxu0
        %v701 = vadd.f32 %v556, %v700
        %v702 = vpop.f32.mrf.mxu0
        %703 = vmatprep.mubr.f32.mxu0 %v312
        %704 = vmatmul.mubr.f32.gmra.mxu0 %v311
        %v705 = vpop.f32.mrf.mxu0
        %v706 = vadd.f32 %v561, %v705
        %v707 = vpop.f32.mrf.mxu0
        %708 = vmatprep.mubr.f32.mxu0 %v318
        %709 = vmatmul.mubr.f32.gmra.mxu0 %v317
        %v710 = vpop.f32.mrf.mxu0
        %v711 = vadd.f32 %v566, %v710
        %v712 = vpop.f32.mrf.mxu0
        %713 = vdwg.mxu0
        %714 = vmatprep.subr.mxu0 0.0
        %715 = vmatpush1.msra.mxu0 %v400
        %716 = vmatprep.subr.mxu0 0.0
        %717 = vmatpush1.msra.mxu0 %v399
        %718 = vmatprep.subr.mxu0 0.0
        %719 = vmatpush1.msra.mxu0 %v398
        %720 = vmatprep.subr.mxu0 0.0
        %721 = vmatpush1.msra.mxu0 %v397
        %722 = vmatprep.subr.mxu0 0.0
        %723 = vmatpush1.msra.mxu0 %v396
        %724 = vmatprep.subr.mxu0 0.0
        %725 = vmatpush1.msra.mxu0 %v395
        %726 = vmatprep.subr.mxu0 0.0
        %727 = vmatpush1.msra.mxu0 %v394
        %728 = vmatprep.subr.mxu0 0.0
        %729 = vmatpush1.msra.mxu0 %v393
        %730 = vmatprep.subr.mxu0 0.0
        %731 = vmatpush1.msra.mxu0 %v392
        %732 = vmatprep.subr.mxu0 0.0
        %733 = vmatpush1.msra.mxu0 %v391
        %734 = vmatprep.subr.mxu0 0.0
        %735 = vmatpush1.msra.mxu0 %v390
        %736 = vmatprep.subr.mxu0 0.0
        %737 = vmatpush1.msra.mxu0 %v389
        %738 = vmatprep.subr.mxu0 0.0
        %739 = vmatpush1.msra.mxu0 %v388
        %740 = vmatprep.subr.mxu0 0.0
        %741 = vmatpush1.msra.mxu0 %v387
        %742 = vmatprep.subr.mxu0 0.0
        %743 = vmatpush1.msra.mxu0 %v386
        %744 = vmatprep.subr.mxu0 0.0
        %745 = vmatpush1.msra.mxu0 %v385
        %746 = vmatprep.subr.mxu0 0.0
        %747 = vmatpush2.msra.mxu0 %v416
        %748 = vmatprep.subr.mxu0 0.0
        %749 = vmatpush2.msra.mxu0 %v415
        %750 = vmatprep.subr.mxu0 0.0
        %751 = vmatpush2.msra.mxu0 %v414
        %752 = vmatprep.subr.mxu0 0.0
        %753 = vmatpush2.msra.mxu0 %v413
        %754 = vmatprep.subr.mxu0 0.0
        %755 = vmatpush2.msra.mxu0 %v412
        %756 = vmatprep.subr.mxu0 0.0
        %757 = vmatpush2.msra.mxu0 %v411
        %758 = vmatprep.subr.mxu0 0.0
        %759 = vmatpush2.msra.mxu0 %v410
        %760 = vmatprep.subr.mxu0 0.0
        %761 = vmatpush2.msra.mxu0 %v409
        %762 = vmatprep.subr.mxu0 0.0
        %763 = vmatpush2.msra.mxu0 %v408
        %764 = vmatprep.subr.mxu0 0.0
        %765 = vmatpush2.msra.mxu0 %v407
        %766 = vmatprep.subr.mxu0 0.0
        %767 = vmatpush2.msra.mxu0 %v406
        %768 = vmatprep.subr.mxu0 0.0
        %769 = vmatpush2.msra.mxu0 %v405
        %770 = vmatprep.subr.mxu0 0.0
        %771 = vmatpush2.msra.mxu0 %v404
        %772 = vmatprep.subr.mxu0 0.0
        %773 = vmatpush2.msra.mxu0 %v403
        %774 = vmatprep.subr.mxu0 0.0
        %775 = vmatpush2.msra.mxu0 %v402
        %776 = vmatprep.subr.mxu0 0.0
        %777 = vmatpush2.msra.mxu0 %v401
        %778 = vmatprep.mubr.f32.mxu0 %v230
        %779 = vmatmul.mubr.f32.gmra.mxu0 %v229
        %v780 = vpop.f32.mrf.mxu0
        %v781 = vadd.f32 %v636, %v780
        %v782 = vpop.f32.mrf.mxu0
        %783 = vmatprep.mubr.f32.mxu0 %v236
        %784 = vmatmul.mubr.f32.gmra.mxu0 %v235
        %v785 = vpop.f32.mrf.mxu0
        %v786 = vadd.f32 %v641, %v785
        %v787 = vpop.f32.mrf.mxu0
        %788 = vmatprep.mubr.f32.mxu0 %v242
        %789 = vmatmul.mubr.f32.gmra.mxu0 %v241
        %v790 = vpop.f32.mrf.mxu0
        %v791 = vadd.f32 %v646, %v790
        %v792 = vpop.f32.mrf.mxu0
        %793 = vmatprep.mubr.f32.mxu0 %v248
        %794 = vmatmul.mubr.f32.gmra.mxu0 %v247
        %v795 = vpop.f32.mrf.mxu0
        %v796 = vadd.f32 %v651, %v795
        %v797 = vpop.f32.mrf.mxu0
        %798 = vmatprep.mubr.f32.mxu0 %v254
        %799 = vmatmul.mubr.f32.gmra.mxu0 %v253
        %v800 = vpop.f32.mrf.mxu0
        %v801 = vadd.f32 %v656, %v800
        %v802 = vpop.f32.mrf.mxu0
        %803 = vmatprep.mubr.f32.mxu0 %v260
        %804 = vmatmul.mubr.f32.gmra.mxu0 %v259
        %v805 = vpop.f32.mrf.mxu0
        %v806 = vadd.f32 %v661, %v805
        %v807 = vpop.f32.mrf.mxu0
        %808 = vmatprep.mubr.f32.mxu0 %v266
        %809 = vmatmul.mubr.f32.gmra.mxu0 %v265
        %v810 = vpop.f32.mrf.mxu0
        %v811 = vadd.f32 %v666, %v810
        %v812 = vpop.f32.mrf.mxu0
        %813 = vmatprep.mubr.f32.mxu0 %v272
        %814 = vmatmul.mubr.f32.gmra.mxu0 %v271
        %v815 = vpop.f32.mrf.mxu0
        %v816 = vadd.f32 %v671, %v815
        %v817 = vpop.f32.mrf.mxu0
        %818 = vmatprep.mubr.f32.mxu0 %v278
        %819 = vmatmul.mubr.f32.gmra.mxu0 %v277
        %v820 = vpop.f32.mrf.mxu0
        %v821 = vadd.f32 %v676, %v820
        %v822 = vpop.f32.mrf.mxu0
        %823 = vmatprep.mubr.f32.mxu0 %v284
        %824 = vmatmul.mubr.f32.gmra.mxu0 %v283
        %v825 = vpop.f32.mrf.mxu0
        %v826 = vadd.f32 %v681, %v825
        %v827 = vpop.f32.mrf.mxu0
        %828 = vmatprep.mubr.f32.mxu0 %v290
        %829 = vmatmul.mubr.f32.gmra.mxu0 %v289
        %v830 = vpop.f32.mrf.mxu0
        %v831 = vadd.f32 %v686, %v830
        %v832 = vpop.f32.mrf.mxu0
        %833 = vmatprep.mubr.f32.mxu0 %v296
        %834 = vmatmul.mubr.f32.gmra.mxu0 %v295
        %v835 = vpop.f32.mrf.mxu0
        %v836 = vadd.f32 %v691, %v835
        %v837 = vpop.f32.mrf.mxu0
        %838 = vmatprep.mubr.f32.mxu0 %v302
        %839 = vmatmul.mubr.f32.gmra.mxu0 %v301
        %v840 = vpop.f32.mrf.mxu0
        %v841 = vadd.f32 %v696, %v840
        %v842 = vpop.f32.mrf.mxu0
        %843 = vmatprep.mubr.f32.mxu0 %v308
        %844 = vmatmul.mubr.f32.gmra.mxu0 %v307
        %v845 = vpop.f32.mrf.mxu0
        %v846 = vadd.f32 %v701, %v845
        %v847 = vpop.f32.mrf.mxu0
        %848 = vmatprep.mubr.f32.mxu0 %v314
        %849 = vmatmul.mubr.f32.gmra.mxu0 %v313
        %v850 = vpop.f32.mrf.mxu0
        %v851 = vadd.f32 %v706, %v850
        %v852 = vpop.f32.mrf.mxu0
        %853 = vmatprep.mubr.f32.mxu0 %v320
        %854 = vmatmul.mubr.f32.gmra.mxu0 %v319
        %v855 = vpop.f32.mrf.mxu0
        %v856 = vadd.f32 %v711, %v855
        %v857 = vpop.f32.mrf.mxu0
        %858 = vdwg.mxu0
        %v859 = vmax.f32 %v781, 0.0
        %v860 = vmax.f32 %v786, 0.0
        %v861 = vmax.f32 %v791, 0.0
        %v862 = vmax.f32 %v796, 0.0
        %v863 = vmax.f32 %v801, 0.0
        %v864 = vmax.f32 %v806, 0.0
        %v865 = vmax.f32 %v811, 0.0
        %v866 = vmax.f32 %v816, 0.0
        %v867 = vmax.f32 %v821, 0.0
        %v868 = vmax.f32 %v826, 0.0
        %v869 = vmax.f32 %v831, 0.0
        %v870 = vmax.f32 %v836, 0.0
        %v871 = vmax.f32 %v841, 0.0
        %v872 = vmax.f32 %v846, 0.0
        %v873 = vmax.f32 %v851, 0.0
        %v874 = vmax.f32 %v856, 0.0
        %875 = vst [vmem:[%s222] sm:$0xff] %v859
        %876 = vst [vmem:[%s222 + $0x8] sm:$0xff] %v860
        %877 = vst [vmem:[%s222 + $0x10] sm:$0xff] %v861
        %878 = vst [vmem:[%s222 + $0x18] sm:$0xff] %v862
        %879 = vst [vmem:[%s222 + $0x20] sm:$0xff] %v863
        %880 = vst [vmem:[%s222 + $0x28] sm:$0xff] %v864
        %881 = vst [vmem:[%s222 + $0x30] sm:$0xff] %v865
        %882 = vst [vmem:[%s222 + $0x38] sm:$0xff] %v866
        %883 = vst [vmem:[%s222 + $0x40] sm:$0xff] %v867
        %884 = vst [vmem:[%s222 + $0x48] sm:$0xff] %v868
        %885 = vst [vmem:[%s222 + $0x50] sm:$0xff] %v869
        %886 = vst [vmem:[%s222 + $0x58] sm:$0xff] %v870
        %887 = vst [vmem:[%s222 + $0x60] sm:$0xff] %v871
        %888 = vst [vmem:[%s222 + $0x68] sm:$0xff] %v872
        %889 = vst [vmem:[%s222 + $0x70] sm:$0xff] %v873
        %890 = vst [vmem:[%s222 + $0x78] sm:$0xff] %v874
        %s891 = sand.u32 %s113, 1
        %s892 = scalar_lea.sflag [#allocation4], %s891
        %s893 = sand.u32 %s113, 1
        %s894 = smul.addr %s893, 128
        %s895 = scalar_lea.vmem [#allocation7], %s894
        // Predicated region
        $region41: #{tpu_custom_call.1} parent=31 // pred_check
          %p896 = pneg %p123
        $region42: #{tpu_custom_call.1} parent=31 // pred_check_branch
          %898 = sbr.rel (%p896) target = $region44
        $region43: #{tpu_custom_call.1} parent=31 // pred_region
          %s899 = smul.u32 16, %s26
          %s901 = ssub.s32 2048, 2048
          %902 = vsyncadd %s892, %s901
          %s903 = smul.addr %s25, 16
          %s904 = sadd.s32 %s899, %s903
          %s905 = smul.addr %s904, 128
          %s906 = scalar_lea.hbm %s3, %s905
          %s907 = sshll.u32 %s895, 4
          %s908 = int_to_ptr.vmem [resolvable:$true] %s907
          %913 = dma.vmem_to_hbm [thread:$0]  %s908, 2048, %s906, %s892, 128, 128, 8
        $region44: #{tpu_custom_call.1} parent=31 // pred_fallthru
          _
      $region32: #{tpu_custom_call.1} parent=5 // pred_fallthru
        _
      %p914 = scmp.le.s32.totalorder 2, %s16
      // Predicated region
      $region45: #{tpu_custom_call.1} parent=5 // pred_check
        %p915 = pneg %p914
      $region46: #{tpu_custom_call.1} parent=5 // pred_check_branch
        %917 = sbr.rel (%p915) target = $region48
      $region47: #{tpu_custom_call.1} parent=5 // pred_region
        %s918 = ssub.s32 %s16, 2
        // Predicated region
        $region49: #{tpu_custom_call.1} parent=47 // pred_check
          %p919 = pneg %p129
        $region50: #{tpu_custom_call.1} parent=47 // pred_check_branch
          %921 = sbr.rel (%p919) target = $region52
        $region51: #{tpu_custom_call.1} parent=47 // pred_region
          %s922 = sand.u32 %s114, 1
          %s923 = scalar_lea.sflag [#allocation4], %s922
          %s924 = sand.u32 %s114, 1
          %s925 = smul.addr %s924, 128
          %s926 = scalar_lea.vmem [#allocation7], %s925
          %927 = dma.done %s923, 2048
        $region52: #{tpu_custom_call.1} parent=47 // pred_fallthru
          _
      $region48: #{tpu_custom_call.1} parent=5 // pred_fallthru
        _
    $region6: #{tpu_custom_call.1} parent=1 // loop_footer
      %s20 = sadd.s32 1, %s16
    $region7: #{tpu_custom_call.1} parent=1 // loop_footer_branch
      %15 = sbr.rel target = $region3
    $region8: #{tpu_custom_call.1} parent=1 // loop_exit
      _
    %928 = vsyncpa [#allocation3], 1
    %s929 = scalar_lea.sflag [#allocation3], 1
    %930 = vsyncpa %s929, 1
    %931 = vsyncpa [#allocation6], 1
    %932 = vsyncpa [#allocation4], 1
    %s933 = scalar_lea.sflag [#allocation4], 1
    %934 = vsyncpa %s933, 1

</llo_original>
